<compile_context>
chip_gen: v7x
topology: tpu7x:2x2x1
jax: 0.10.0
libtpu: 0.0.40
codegen_flags: <defaults>
</compile_context>

<pallas_src>
import functools

import jax
import jax.numpy as jnp
import numpy as np
from jax.experimental import pallas as pl
from jax.experimental.pallas import tpu as pltpu

LEAKY_SLOPE = 0.01   # F.leaky_relu default negative_slope
BN_EPS = 1e-5        # nn.BatchNorm1d default eps
LANE = 128
SUBLANE = 8


def _round_up(x, m):
    return (x + m - 1) // m * m


def _leaky_relu(x):
    return jnp.where(x > 0, x, LEAKY_SLOPE * x)


def _pad2d(a, rows, cols):
    return jnp.pad(a, ((0, rows - a.shape[0]), (0, cols - a.shape[1])))


def _param_bytes(pp):
    return sum(int(v.size) * v.dtype.itemsize for v in pp.values())


def _maybe_compiler_params(vmem_est_bytes, dims_sem=None):
    kwargs = {}
    if dims_sem is not None:
        kwargs["dimension_semantics"] = dims_sem
    if vmem_est_bytes > 12 * (1 << 20):
        # Only raise the scoped-VMEM limit when we actually need it (v5e default
        # is 16 MiB).  TODO(synk): cap below 64 MiB physical VMEM on v7x if the
        # hidden dims are ever scaled up far enough to hit this.
        kwargs["vmem_limit_bytes"] = int(min(vmem_est_bytes + (4 << 20), 96 << 20))
    if not kwargs:
        return None
    return pltpu.CompilerParams(**kwargs)


# --------------------------------------------------------------------------
# Kernel A (small/medium batch): fully fused BN-stats + BN-apply + MLP + tanh.
# Whole padded batch is one VMEM block; no grid, single dispatch.
# --------------------------------------------------------------------------
def _actor_fused_kernel(x_ref, gamma_ref, beta_ref,
                        w1_ref, b1_ref, w2_ref, b2_ref, w3_ref, b3_ref,
                        out_ref, *, n_valid):
    x = x_ref[...]                                          # [B_pad, S_pad] f32
    inv_n = 1.0 / n_valid

    # Training-mode BatchNorm statistics over the real rows only (padded rows
    # are zero -> they don't affect the sum; centered variance is masked).
    mean = jnp.sum(x, axis=0, keepdims=True) * inv_n
    valid = jax.lax.broadcasted_iota(jnp.int32, x.shape, 0) < n_valid
    xc = jnp.where(valid, x - mean, 0.0)
    var = jnp.sum(xc * xc, axis=0, keepdims=True) * inv_n

    scale = jax.lax.rsqrt(var + BN_EPS) * gamma_ref[...]
    shift = beta_ref[...] - mean * scale
    x_bn = x * scale + shift                                # fused BN apply

    h1 = _leaky_relu(jnp.dot(x_bn.astype(w1_ref.dtype), w1_ref[...],
                             preferred_element_type=jnp.float32) + b1_ref[...])
    h2 = _leaky_relu(jnp.dot(h1.astype(w2_ref.dtype), w2_ref[...],
                             preferred_element_type=jnp.float32) + b2_ref[...])
    h3 = jnp.dot(h2.astype(w3_ref.dtype), w3_ref[...],
                 preferred_element_type=jnp.float32) + b3_ref[...]
    out_ref[...] = jnp.tanh(h3)


# --------------------------------------------------------------------------
# Kernel B (large batch): BN-apply + MLP + tanh, one batch tile per grid step.
# scale/shift are precomputed (cheap XLA reduction over x); weights stay
# resident in VMEM via constant index_maps.
# --------------------------------------------------------------------------
def _actor_mlp_kernel(x_ref, scale_ref, shift_ref,
                      w1_ref, b1_ref, w2_ref, b2_ref, w3_ref, b3_ref,
                      out_ref):
    x_bn = x_ref[...] * scale_ref[...] + shift_ref[...]     # [TB, S_pad] f32

    h1 = _leaky_relu(jnp.dot(x_bn.astype(w1_ref.dtype), w1_ref[...],
                             preferred_element_type=jnp.float32) + b1_ref[...])
    h2 = _leaky_relu(jnp.dot(h1.astype(w2_ref.dtype), w2_ref[...],
                             preferred_element_type=jnp.float32) + b2_ref[...])
    h3 = jnp.dot(h2.astype(w3_ref.dtype), w3_ref[...],
                 preferred_element_type=jnp.float32) + b3_ref[...]
    out_ref[...] = jnp.tanh(h3)
    # TODO(synk): for very large B the (B_pad x 128) f32 writeback is ~32x the
    # useful action bytes; pack 32 rows of 4 actions per 128-lane row (or emit
    # bf16) if that stream ever dominates.


# --------------------------------------------------------------------------
# One-time parameter preparation: pad to lane-dense shapes, cast matmul dtypes.
# Done OUTSIDE the jitted forward so weights are never re-padded per call.
# --------------------------------------------------------------------------
def prepare_params(params, matmul_dtype=jnp.bfloat16, fc3_dtype=jnp.float32):
    S, H1 = params["w1"].shape
    H2 = params["w2"].shape[1]
    A = params["w3"].shape[1]
    S_pad, H1_pad, H2_pad, A_pad = (_round_up(d, LANE) for d in (S, H1, H2, A))

    f32 = jnp.float32
    return dict(
        gamma=_pad2d(params["gamma"].astype(f32), 1, S_pad),
        beta=_pad2d(params["beta"].astype(f32), 1, S_pad),
        w1=_pad2d(params["w1"].astype(f32), S_pad, H1_pad).astype(matmul_dtype),
        b1=_pad2d(params["b1"].astype(f32), 1, H1_pad),
        w2=_pad2d(params["w2"].astype(f32), H1_pad, H2_pad).astype(matmul_dtype),
        b2=_pad2d(params["b2"].astype(f32), 1, H2_pad),
        w3=_pad2d(params["w3"].astype(f32), H2_pad, A_pad).astype(fc3_dtype),
        b3=_pad2d(params["b3"].astype(f32), 1, A_pad),
    )


# --------------------------------------------------------------------------
# Forward pass.
# --------------------------------------------------------------------------
@functools.partial(jax.jit,
                   static_argnames=("action_size", "batch_tile",
                                    "fused_batch_limit"))
def actor_forward(states, pp, *, action_size, batch_tile=512,
                  fused_batch_limit=1024):
    """states: [B, S] (or [S]) float32.  pp: dict from prepare_params."""
    assert batch_tile % SUBLANE == 0
    squeeze = states.ndim == 1
    if squeeze:
        states = states[None, :]
    states = states.astype(jnp.float32)

    B, S = states.shape
    S_pad = pp["gamma"].shape[1]
    H1_pad = pp["w1"].shape[1]
    H2_pad = pp["w2"].shape[1]
    A_pad = pp["w3"].shape[1]

    x_feat = jnp.pad(states, ((0, 0), (0, S_pad - S)))      # [B, S_pad]

    flops_per_row = 2 * (S_pad * H1_pad + H1_pad * H2_pad + H2_pad * A_pad)
    p_bytes = _param_bytes(pp)

    if B <= fused_batch_limit:
        # ---- single fused kernel, whole batch resident in VMEM ----
        B_pad = _round_up(B, SUBLANE)
        x_p = jnp.pad(x_feat, ((0, B_pad - B), (0, 0)))

        act_bytes = 4 * B_pad * (S_pad + H1_pad + H2_pad + A_pad)
        vmem_est = 4 * B_pad * S_pad + 4 * B_pad * A_pad + p_bytes + act_bytes
        cost = pl.CostEstimate(
            flops=B_pad * flops_per_row,
            transcendentals=B_pad * A_pad + S_pad,
            bytes_accessed=4 * B_pad * (S_pad + A_pad) + p_bytes)

        out_p = pl.pallas_call(
            functools.partial(_actor_fused_kernel, n_valid=B),
            out_shape=jax.ShapeDtypeStruct((B_pad, A_pad), jnp.float32),
            cost_estimate=cost,
            compiler_params=_maybe_compiler_params(vmem_est),
        )(x_p, pp["gamma"], pp["beta"], pp["w1"], pp["b1"],
          pp["w2"], pp["b2"], pp["w3"], pp["b3"])
    else:
        # ---- large batch: cheap XLA BN-stats + gridded MLP kernel ----
        mean = jnp.mean(x_feat, axis=0, keepdims=True)
        var = jnp.mean(jnp.square(x_feat - mean), axis=0, keepdims=True)
        scale = jax.lax.rsqrt(var + BN_EPS) * pp["gamma"]
        shift = pp["beta"] - mean * scale

        TB = _round_up(min(batch_tile, _round_up(B, SUBLANE)), SUBLANE)
        B_pad = _round_up(B, TB)
        nB = B_pad // TB
        x_p = jnp.pad(x_feat, ((0, B_pad - B), (0, 0)))

        vmem_est = (2 * 4 * TB * (S_pad + A_pad)            # dbl-buffered x/out
                    + 2 * p_bytes                           # dbl-buffered params
                    + 4 * TB * (H1_pad + H2_pad))           # intermediates
        cost = pl.CostEstimate(
            flops=B_pad * flops_per_row,
            transcendentals=B_pad * A_pad,
            bytes_accessed=4 * B_pad * (S_pad + A_pad) + p_bytes)

        row_spec = lambda n: pl.BlockSpec((1, n), lambda i: (0, 0))
        out_p = pl.pallas_call(
            _actor_mlp_kernel,
            out_shape=jax.ShapeDtypeStruct((B_pad, A_pad), jnp.float32),
            grid=(nB,),
            in_specs=[
                pl.BlockSpec((TB, S_pad), lambda i: (i, 0)),       # x tile
                row_spec(S_pad),                                   # scale
                row_spec(S_pad),                                   # shift
                pl.BlockSpec((S_pad, H1_pad), lambda i: (0, 0)),   # w1
                row_spec(H1_pad),                                  # b1
                pl.BlockSpec((H1_pad, H2_pad), lambda i: (0, 0)),  # w2
                row_spec(H2_pad),                                  # b2
                pl.BlockSpec((H2_pad, A_pad), lambda i: (0, 0)),   # w3
                row_spec(A_pad),                                   # b3
            ],
            out_specs=pl.BlockSpec((TB, A_pad), lambda i: (i, 0)),
            cost_estimate=cost,
            # TODO(synk): on v7x use pltpu.CORE_PARALLEL here to shard batch
            # tiles across the 2 TensorCores.
            compiler_params=_maybe_compiler_params(vmem_est, ("parallel",)),
        )(x_p, scale, shift, pp["w1"], pp["b1"], pp["w2"], pp["b2"],
          pp["w3"], pp["b3"])

    out = out_p[:B, :action_size]
    if squeeze:
        out = out[0]
    return out


# --------------------------------------------------------------------------
# Parameter init mirroring ActorNetwork.__init__/reset_parameters.
# --------------------------------------------------------------------------
def init_params(key, state_size, hidden_in_dim, hidden_out_dim, action_size):
    """hidden_init() in the reference uses weight.size()[0] == out_features as
    fan_in (quirk of that code); replicated here."""
    ks = jax.random.split(key, 6)

    def uni(k, shape, lim):
        return jax.random.uniform(k, shape, jnp.float32, -lim, lim)

    lim1 = 1.0 / np.sqrt(hidden_in_dim)    # fc1.weight.size()[0] = hidden_in_dim
    lim2 = 1.0 / np.sqrt(hidden_out_dim)   # fc2.weight.size()[0] = hidden_out_dim
    lim3 = 1e-3

    # Weights stored [in, out] (pre-transposed vs. PyTorch).
    w1 = uni(ks[0], (state_size, hidden_in_dim), lim1)
    w2 = uni(ks[1], (hidden_in_dim, hidden_out_dim), lim2)
    w3 = uni(ks[2], (hidden_out_dim, action_size), lim3)

    # Biases keep PyTorch Linear default init U(-1/sqrt(in_features), +).
    b1 = uni(ks[3], (1, hidden_in_dim), 1.0 / np.sqrt(state_size))
    b2 = uni(ks[4], (1, hidden_out_dim), 1.0 / np.sqrt(hidden_in_dim))
    b3 = uni(ks[5], (1, action_size), 1.0 / np.sqrt(hidden_out_dim))

    gamma = jnp.ones((1, state_size), jnp.float32)   # BatchNorm1d defaults
    beta = jnp.zeros((1, state_size), jnp.float32)

    return dict(gamma=gamma, beta=beta, w1=w1, b1=b1, w2=w2, b2=b2, w3=w3, b3=b3)


def reference_forward(states, p):
    """Pure-JAX f32 reference (PyTorch training-mode BatchNorm semantics)."""
    x = states
    mean = jnp.mean(x, axis=0, keepdims=True)
    var = jnp.mean((x - mean) ** 2, axis=0, keepdims=True)
    x = (x - mean) / jnp.sqrt(var + BN_EPS) * p["gamma"] + p["beta"]
    h1 = _leaky_relu(x @ p["w1"] + p["b1"])
    h2 = _leaky_relu(h1 @ p["w2"] + p["b2"])
    return jnp.tanh(h2 @ p["w3"] + p["b3"])


if __name__ == "__main__":
    # Small shapes consistent with the original module usage; B=200 exercises
    # batch/feature padding and (when forced) the 2-tile gridded pipeline.
    B, STATE, H_IN, H_OUT, ACT = 200, 24, 64, 32, 4

    key = jax.random.PRNGKey(0)
    k_x, k_p = jax.random.split(key)

    states = jax.random.normal(k_x, (B, STATE), jnp.float32)
    params = init_params(k_p, STATE, H_IN, H_OUT, ACT)

    ref = np.asarray(jax.block_until_ready(reference_forward(states, params)))

    # 1) Exact-precision path: f32 weights, single fused kernel (default route).
    pp_f32 = prepare_params(params, matmul_dtype=jnp.float32)
    out_f32 = jax.block_until_ready(actor_forward(states, pp_f32, action_size=ACT))
    np.testing.assert_allclose(np.asarray(out_f32), ref, rtol=1e-4, atol=1e-4)

    # 2) Default bf16 fc1/fc2 path (MXU-native on v6e/v7x), fused kernel.
    pp_bf16 = prepare_params(params)   # bf16 w1/w2, f32 w3
    out_bf16 = jax.block_until_ready(actor_forward(states, pp_bf16, action_size=ACT))
    np.testing.assert_allclose(np.asarray(out_bf16), ref, rtol=5e-2, atol=5e-2)

    # 3) Large-batch gridded path, forced at small size to exercise it.
    out_grid = jax.block_until_ready(
        actor_forward(states, pp_f32, action_size=ACT,
                      batch_tile=128, fused_batch_limit=0))
    np.testing.assert_allclose(np.asarray(out_grid), ref, rtol=1e-4, atol=1e-4)

    print("KERNEL_OK")
</pallas_src>

<mosaic_0001>
module attributes {stable_mosaic.version = 11 : i64} {
  func.func @_actor_fused_kernel(%arg0: memref<200x128xf32, #tpu.memory_space<vmem>>, %arg1: memref<1x128xf32, #tpu.memory_space<vmem>>, %arg2: memref<1x128xf32, #tpu.memory_space<vmem>>, %arg3: memref<128x128xf32, #tpu.memory_space<vmem>>, %arg4: memref<1x128xf32, #tpu.memory_space<vmem>>, %arg5: memref<128x128xf32, #tpu.memory_space<vmem>>, %arg6: memref<1x128xf32, #tpu.memory_space<vmem>>, %arg7: memref<128x128xf32, #tpu.memory_space<vmem>>, %arg8: memref<1x128xf32, #tpu.memory_space<vmem>>, %arg9: memref<200x128xf32, #tpu.memory_space<vmem>>) attributes {dimension_semantics = [], scalar_prefetch = 0 : i64, scratch_operands = 0 : i64, tpu.core_type = #tpu.core_type<tc>} {
    %c0 = arith.constant 0 : index
    %c0_0 = arith.constant 0 : index
    %0 = vector.load %arg0[%c0, %c0_0] : memref<200x128xf32, #tpu.memory_space<vmem>>, vector<200x128xf32>
    %cst = arith.constant dense<0.000000e+00> : vector<128xf32>
    %1 = vector.multi_reduction <add>, %0, %cst [0] : vector<200x128xf32> to vector<128xf32>
    %2 = vector.shape_cast %1 : vector<128xf32> to vector<1x128xf32>
    %cst_1 = arith.constant 5.000000e-03 : f32
    %3 = vector.broadcast %cst_1 : f32 to vector<1x128xf32>
    %4 = arith.mulf %2, %3 : vector<1x128xf32>
    %5 = tpu.iota {dimensions = array<i32: 0>} : vector<200x128xi32>
    %c200_i32 = arith.constant 200 : i32
    %6 = vector.broadcast %c200_i32 : i32 to vector<200x128xi32>
    %7 = arith.cmpi slt, %5, %6 : vector<200x128xi32>
    %8 = vector.broadcast %4 : vector<1x128xf32> to vector<200x128xf32>
    %9 = arith.subf %0, %8 : vector<200x128xf32>
    %cst_2 = arith.constant 0.000000e+00 : f32
    %10 = vector.broadcast %cst_2 : f32 to vector<200x128xf32>
    %11 = arith.select %7, %9, %10 : vector<200x128xi1>, vector<200x128xf32>
    %12 = arith.mulf %11, %11 : vector<200x128xf32>
    %cst_3 = arith.constant dense<0.000000e+00> : vector<128xf32>
    %13 = vector.multi_reduction <add>, %12, %cst_3 [0] : vector<200x128xf32> to vector<128xf32>
    %14 = vector.shape_cast %13 : vector<128xf32> to vector<1x128xf32>
    %cst_4 = arith.constant 5.000000e-03 : f32
    %15 = vector.broadcast %cst_4 : f32 to vector<1x128xf32>
    %16 = arith.mulf %14, %15 : vector<1x128xf32>
    %cst_5 = arith.constant 9.99999974E-6 : f32
    %17 = vector.broadcast %cst_5 : f32 to vector<1x128xf32>
    %18 = arith.addf %16, %17 : vector<1x128xf32>
    %19 = math.rsqrt %18 : vector<1x128xf32>
    %c0_6 = arith.constant 0 : index
    %c0_7 = arith.constant 0 : index
    %20 = vector.load %arg1[%c0_6, %c0_7] : memref<1x128xf32, #tpu.memory_space<vmem>>, vector<1x128xf32>
    %21 = arith.mulf %19, %20 : vector<1x128xf32>
    %c0_8 = arith.constant 0 : index
    %c0_9 = arith.constant 0 : index
    %22 = vector.load %arg2[%c0_8, %c0_9] : memref<1x128xf32, #tpu.memory_space<vmem>>, vector<1x128xf32>
    %23 = arith.mulf %4, %21 : vector<1x128xf32>
    %24 = arith.subf %22, %23 : vector<1x128xf32>
    %25 = vector.broadcast %21 : vector<1x128xf32> to vector<200x128xf32>
    %26 = arith.mulf %0, %25 : vector<200x128xf32>
    %27 = vector.broadcast %24 : vector<1x128xf32> to vector<200x128xf32>
    %28 = arith.addf %26, %27 : vector<200x128xf32>
    %c0_10 = arith.constant 0 : index
    %c0_11 = arith.constant 0 : index
    %29 = vector.load %arg3[%c0_10, %c0_11] : memref<128x128xf32, #tpu.memory_space<vmem>>, vector<128x128xf32>
    %cst_12 = arith.constant dense<0.000000e+00> : vector<200x128xf32>
    %30 = tpu.matmul %28, %29, %cst_12 {dimension_numbers = #tpu.dot_dimension_numbers<[1], [0], [0], [1], [0, 0, 1, 1], [], []>} : vector<200x128xf32>, vector<128x128xf32>, vector<200x128xf32> -> vector<200x128xf32>
    %c0_13 = arith.constant 0 : index
    %c0_14 = arith.constant 0 : index
    %31 = vector.load %arg4[%c0_13, %c0_14] : memref<1x128xf32, #tpu.memory_space<vmem>>, vector<1x128xf32>
    %32 = vector.broadcast %31 : vector<1x128xf32> to vector<200x128xf32>
    %33 = arith.addf %30, %32 : vector<200x128xf32>
    %cst_15 = arith.constant 0.000000e+00 : f32
    %34 = vector.broadcast %cst_15 : f32 to vector<200x128xf32>
    %35 = arith.cmpf ogt, %33, %34 : vector<200x128xf32>
    %cst_16 = arith.constant 0.00999999977 : f32
    %36 = vector.broadcast %cst_16 : f32 to vector<200x128xf32>
    %37 = arith.mulf %36, %33 : vector<200x128xf32>
    %38 = arith.select %35, %33, %37 : vector<200x128xi1>, vector<200x128xf32>
    %c0_17 = arith.constant 0 : index
    %c0_18 = arith.constant 0 : index
    %39 = vector.load %arg5[%c0_17, %c0_18] : memref<128x128xf32, #tpu.memory_space<vmem>>, vector<128x128xf32>
    %cst_19 = arith.constant dense<0.000000e+00> : vector<200x128xf32>
    %40 = tpu.matmul %38, %39, %cst_19 {dimension_numbers = #tpu.dot_dimension_numbers<[1], [0], [0], [1], [0, 0, 1, 1], [], []>} : vector<200x128xf32>, vector<128x128xf32>, vector<200x128xf32> -> vector<200x128xf32>
    %c0_20 = arith.constant 0 : index
    %c0_21 = arith.constant 0 : index
    %41 = vector.load %arg6[%c0_20, %c0_21] : memref<1x128xf32, #tpu.memory_space<vmem>>, vector<1x128xf32>
    %42 = vector.broadcast %41 : vector<1x128xf32> to vector<200x128xf32>
    %43 = arith.addf %40, %42 : vector<200x128xf32>
    %cst_22 = arith.constant 0.000000e+00 : f32
    %44 = vector.broadcast %cst_22 : f32 to vector<200x128xf32>
    %45 = arith.cmpf ogt, %43, %44 : vector<200x128xf32>
    %cst_23 = arith.constant 0.00999999977 : f32
    %46 = vector.broadcast %cst_23 : f32 to vector<200x128xf32>
    %47 = arith.mulf %46, %43 : vector<200x128xf32>
    %48 = arith.select %45, %43, %47 : vector<200x128xi1>, vector<200x128xf32>
    %c0_24 = arith.constant 0 : index
    %c0_25 = arith.constant 0 : index
    %49 = vector.load %arg7[%c0_24, %c0_25] : memref<128x128xf32, #tpu.memory_space<vmem>>, vector<128x128xf32>
    %cst_26 = arith.constant dense<0.000000e+00> : vector<200x128xf32>
    %50 = tpu.matmul %48, %49, %cst_26 {dimension_numbers = #tpu.dot_dimension_numbers<[1], [0], [0], [1], [0, 0, 1, 1], [], []>} : vector<200x128xf32>, vector<128x128xf32>, vector<200x128xf32> -> vector<200x128xf32>
    %c0_27 = arith.constant 0 : index
    %c0_28 = arith.constant 0 : index
    %51 = vector.load %arg8[%c0_27, %c0_28] : memref<1x128xf32, #tpu.memory_space<vmem>>, vector<1x128xf32>
    %52 = vector.broadcast %51 : vector<1x128xf32> to vector<200x128xf32>
    %53 = arith.addf %50, %52 : vector<200x128xf32>
    %54 = math.tanh %53 : vector<200x128xf32>
    %c0_29 = arith.constant 0 : index
    %c0_30 = arith.constant 0 : index
    %55 = vector.load %arg9[%c0_29, %c0_30] : memref<200x128xf32, #tpu.memory_space<vmem>>, vector<200x128xf32>
    tpu.vector_store %arg9[%c0_29, %c0_30], %54 {strides = array<i32>} : memref<200x128xf32, #tpu.memory_space<vmem>>, vector<200x128xf32>,
    return
  }
}

</mosaic_0001>

<llo_original>
// kernel: actor_forward.1
$region0: #{actor_forward.1}
  #allocation0 [shape = 'u32[]', space=smem, size = 0x4, offset = 0x4, fixed_abs, tag = 'smem constant byte address 0x4 - core index']
  #allocation1 [shape = 'u32[144,128]{1,0:T(1,128)}', space=vmem, size = 0x12000, scoped, tag = 'internal scratch']
  %s0 = inlined_call_operand.vmem [shape: f32[200,128], index: 0, kind: input, shape index: {}]
  %s1 = inlined_call_operand.vmem [shape: f32[1,128], index: 1, kind: input, shape index: {}]
  %s2 = inlined_call_operand.vmem [shape: f32[1,128], index: 2, kind: input, shape index: {}]
  %s3 = inlined_call_operand.vmem [shape: f32[128,128], index: 3, kind: input, shape index: {}]
  %s4 = inlined_call_operand.vmem [shape: f32[1,128], index: 4, kind: input, shape index: {}]
  %s5 = inlined_call_operand.vmem [shape: f32[128,128], index: 5, kind: input, shape index: {}]
  %s6 = inlined_call_operand.vmem [shape: f32[1,128], index: 6, kind: input, shape index: {}]
  %s7 = inlined_call_operand.vmem [shape: f32[128,128], index: 7, kind: input, shape index: {}]
  %s8 = inlined_call_operand.vmem [shape: f32[1,128], index: 8, kind: input, shape index: {}]
  %s9 = inlined_call_operand.vmem [shape: f32[200,128], index: 9, kind: output, shape index: {}]
  %s10 = sld [smem:[#allocation0]]
  $region46: #{actor_forward.1} parent=0
    _
  %s12 = ssub.s32 1, %s10
  %s13 = scalar_select 0, %s12, %s10
  // Predicated region
  $region2: #{actor_forward.1} parent=0 // pred_check
    _
  $region3: #{actor_forward.1} parent=0 // pred_check_branch
    %15 = sbr.rel (0) target = $region5
  $region4: #{actor_forward.1} parent=0 // pred_region
    _
  $region5: #{actor_forward.1} parent=0 // pred_fallthru
    _
  // Predicated region
  $region6: #{actor_forward.1} parent=0 // pred_check
    _
  $region7: #{actor_forward.1} parent=0 // pred_check_branch
    %17 = sbr.rel (0) target = $region9
  $region8: #{actor_forward.1} parent=0 // pred_region
    _
  $region9: #{actor_forward.1} parent=0 // pred_fallthru
    _
  // Predicated region
  $region10: #{actor_forward.1} parent=0 // pred_check
    _
  $region11: #{actor_forward.1} parent=0 // pred_check_branch
    %19 = sbr.rel (0) target = $region13
  $region12: #{actor_forward.1} parent=0 // pred_region
    _
  $region13: #{actor_forward.1} parent=0 // pred_fallthru
    _
  // Predicated region
  $region14: #{actor_forward.1} parent=0 // pred_check
    _
  $region15: #{actor_forward.1} parent=0 // pred_check_branch
    %21 = sbr.rel (0) target = $region17
  $region16: #{actor_forward.1} parent=0 // pred_region
    _
  $region17: #{actor_forward.1} parent=0 // pred_fallthru
    _
  // Predicated region
  $region18: #{actor_forward.1} parent=0 // pred_check
    _
  $region19: #{actor_forward.1} parent=0 // pred_check_branch
    %23 = sbr.rel (0) target = $region21
  $region20: #{actor_forward.1} parent=0 // pred_region
    _
  $region21: #{actor_forward.1} parent=0 // pred_fallthru
    _
  // Predicated region
  $region22: #{actor_forward.1} parent=0 // pred_check
    _
  $region23: #{actor_forward.1} parent=0 // pred_check_branch
    %25 = sbr.rel (0) target = $region25
  $region24: #{actor_forward.1} parent=0 // pred_region
    _
  $region25: #{actor_forward.1} parent=0 // pred_fallthru
    _
  // Predicated region
  $region26: #{actor_forward.1} parent=0 // pred_check
    _
  $region27: #{actor_forward.1} parent=0 // pred_check_branch
    %27 = sbr.rel (0) target = $region29
  $region28: #{actor_forward.1} parent=0 // pred_region
    _
  $region29: #{actor_forward.1} parent=0 // pred_fallthru
    _
  // Predicated region
  $region30: #{actor_forward.1} parent=0 // pred_check
    _
  $region31: #{actor_forward.1} parent=0 // pred_check_branch
    %29 = sbr.rel (0) target = $region33
  $region32: #{actor_forward.1} parent=0 // pred_region
    _
  $region33: #{actor_forward.1} parent=0 // pred_fallthru
    _
  // Predicated region
  $region34: #{actor_forward.1} parent=0 // pred_check
    _
  $region35: #{actor_forward.1} parent=0 // pred_check_branch
    %31 = sbr.rel (0) target = $region37
  $region36: #{actor_forward.1} parent=0 // pred_region
    _
  $region37: #{actor_forward.1} parent=0 // pred_fallthru
    _
  %v32 = vld [vmem:[%s0] sm:$0xff]
  %v33 = vld [vmem:[%s0 + $0x8] sm:$0xff]
  %v34 = vld [vmem:[%s0 + $0x10] sm:$0xff]
  %v35 = vld [vmem:[%s0 + $0x18] sm:$0xff]
  %v36 = vld [vmem:[%s0 + $0x20] sm:$0xff]
  %v37 = vld [vmem:[%s0 + $0x28] sm:$0xff]
  %v38 = vld [vmem:[%s0 + $0x30] sm:$0xff]
  %v39 = vld [vmem:[%s0 + $0x38] sm:$0xff]
  %v40 = vld [vmem:[%s0 + $0x40] sm:$0xff]
  %v41 = vld [vmem:[%s0 + $0x48] sm:$0xff]
  %v42 = vld [vmem:[%s0 + $0x50] sm:$0xff]
  %v43 = vld [vmem:[%s0 + $0x58] sm:$0xff]
  %v44 = vld [vmem:[%s0 + $0x60] sm:$0xff]
  %v45 = vld [vmem:[%s0 + $0x68] sm:$0xff]
  %v46 = vld [vmem:[%s0 + $0x70] sm:$0xff]
  %v47 = vld [vmem:[%s0 + $0x78] sm:$0xff]
  %v48 = vld [vmem:[%s0 + $0x80] sm:$0xff]
  %v49 = vld [vmem:[%s0 + $0x88] sm:$0xff]
  %v50 = vld [vmem:[%s0 + $0x90] sm:$0xff]
  %v51 = vld [vmem:[%s0 + $0x98] sm:$0xff]
  %v52 = vld [vmem:[%s0 + $0xa0] sm:$0xff]
  %v53 = vld [vmem:[%s0 + $0xa8] sm:$0xff]
  %v54 = vld [vmem:[%s0 + $0xb0] sm:$0xff]
  %v55 = vld [vmem:[%s0 + $0xb8] sm:$0xff]
  %v56 = vld [vmem:[%s0 + $0xc0] sm:$0xff]
  %v57 = vadd.f32 %v32, %v33
  %v58 = vadd.f32 %v57, %v34
  %v59 = vadd.f32 %v58, %v35
  %v60 = vadd.f32 %v59, %v36
  %v61 = vadd.f32 %v60, %v37
  %v62 = vadd.f32 %v61, %v38
  %v63 = vadd.f32 %v62, %v39
  %v64 = vadd.f32 %v63, %v40
  %v65 = vadd.f32 %v64, %v41
  %v66 = vadd.f32 %v65, %v42
  %v67 = vadd.f32 %v66, %v43
  %v68 = vadd.f32 %v67, %v44
  %v69 = vadd.f32 %v68, %v45
  %v70 = vadd.f32 %v69, %v46
  %v71 = vadd.f32 %v70, %v47
  %v72 = vadd.f32 %v71, %v48
  %v73 = vadd.f32 %v72, %v49
  %v74 = vadd.f32 %v73, %v50
  %v75 = vadd.f32 %v74, %v51
  %v76 = vadd.f32 %v75, %v52
  %v77 = vadd.f32 %v76, %v53
  %v78 = vadd.f32 %v77, %v54
  %v79 = vadd.f32 %v78, %v55
  %v80 = vadd.f32 %v79, %v56
  %v81 = vrot.slane %v80, 4
  %v82 = vadd.f32 %v80, %v81
  %v83 = vrot.slane %v82, 2
  %v84 = vadd.f32 %v82, %v83
  %v85 = vrot.slane %v84, 1
  %v86 = vadd.f32 %v84, %v85
  %v87 = vmul.f32 %v86, 0.005
  %v88 = vlaneseq
  %v89 = vshrl.u32 %v88, 7
  %v90 = vadd.s32 %v89, 8
  %v91 = vadd.s32 %v89, 16
  %v92 = vadd.s32 %v89, 24
  %v93 = vadd.s32 %v89, 32
  %v94 = vadd.s32 %v89, 40
  %v95 = vadd.s32 %v89, 48
  %v96 = vadd.s32 %v89, 56
  %v97 = vadd.s32 %v89, 64
  %v98 = vadd.s32 %v89, 72
  %v99 = vadd.s32 %v89, 80
  %v100 = vadd.s32 %v89, 88
  %v101 = vadd.s32 %v89, 96
  %v102 = vadd.s32 %v89, 104
  %v103 = vadd.s32 %v89, 112
  %v104 = vadd.s32 %v89, 120
  %v105 = vadd.s32 %v89, 128
  %v106 = vadd.s32 %v89, 136
  %v107 = vadd.s32 %v89, 144
  %v108 = vadd.s32 %v89, 152
  %v109 = vadd.s32 %v89, 160
  %v110 = vadd.s32 %v89, 168
  %v111 = vadd.s32 %v89, 176
  %v112 = vadd.s32 %v89, 184
  %v113 = vadd.s32 %v89, 192
  %vm114 = vcmp.lt.s32.totalorder %v89, 200
  %vm115 = vcmp.lt.s32.totalorder %v90, 200
  %vm116 = vcmp.lt.s32.totalorder %v91, 200
  %vm117 = vcmp.lt.s32.totalorder %v92, 200
  %vm118 = vcmp.lt.s32.totalorder %v93, 200
  %vm119 = vcmp.lt.s32.totalorder %v94, 200
  %vm120 = vcmp.lt.s32.totalorder %v95, 200
  %vm121 = vcmp.lt.s32.totalorder %v96, 200
  %vm122 = vcmp.lt.s32.totalorder %v97, 200
  %vm123 = vcmp.lt.s32.totalorder %v98, 200
  %vm124 = vcmp.lt.s32.totalorder %v99, 200
  %vm125 = vcmp.lt.s32.totalorder %v100, 200
  %vm126 = vcmp.lt.s32.totalorder %v101, 200
  %vm127 = vcmp.lt.s32.totalorder %v102, 200
  %vm128 = vcmp.lt.s32.totalorder %v103, 200
  %vm129 = vcmp.lt.s32.totalorder %v104, 200
  %vm130 = vcmp.lt.s32.totalorder %v105, 200
  %vm131 = vcmp.lt.s32.totalorder %v106, 200
  %vm132 = vcmp.lt.s32.totalorder %v107, 200
  %vm133 = vcmp.lt.s32.totalorder %v108, 200
  %vm134 = vcmp.lt.s32.totalorder %v109, 200
  %vm135 = vcmp.lt.s32.totalorder %v110, 200
  %vm136 = vcmp.lt.s32.totalorder %v111, 200
  %vm137 = vcmp.lt.s32.totalorder %v112, 200
  %vm138 = vcmp.lt.s32.totalorder %v113, 200
  %v139 = vsub.f32 %v32, %v87
  %v140 = vsub.f32 %v33, %v87
  %v141 = vsub.f32 %v34, %v87
  %v142 = vsub.f32 %v35, %v87
  %v143 = vsub.f32 %v36, %v87
  %v144 = vsub.f32 %v37, %v87
  %v145 = vsub.f32 %v38, %v87
  %v146 = vsub.f32 %v39, %v87
  %v147 = vsub.f32 %v40, %v87
  %v148 = vsub.f32 %v41, %v87
  %v149 = vsub.f32 %v42, %v87
  %v150 = vsub.f32 %v43, %v87
  %v151 = vsub.f32 %v44, %v87
  %v152 = vsub.f32 %v45, %v87
  %v153 = vsub.f32 %v46, %v87
  %v154 = vsub.f32 %v47, %v87
  %v155 = vsub.f32 %v48, %v87
  %v156 = vsub.f32 %v49, %v87
  %v157 = vsub.f32 %v50, %v87
  %v158 = vsub.f32 %v51, %v87
  %v159 = vsub.f32 %v52, %v87
  %v160 = vsub.f32 %v53, %v87
  %v161 = vsub.f32 %v54, %v87
  %v162 = vsub.f32 %v55, %v87
  %v163 = vsub.f32 %v56, %v87
  %v164 = vsel %vm114, %v139, 0.0
  %v165 = vsel %vm115, %v140, 0.0
  %v166 = vsel %vm116, %v141, 0.0
  %v167 = vsel %vm117, %v142, 0.0
  %v168 = vsel %vm118, %v143, 0.0
  %v169 = vsel %vm119, %v144, 0.0
  %v170 = vsel %vm120, %v145, 0.0
  %v171 = vsel %vm121, %v146, 0.0
  %v172 = vsel %vm122, %v147, 0.0
  %v173 = vsel %vm123, %v148, 0.0
  %v174 = vsel %vm124, %v149, 0.0
  %v175 = vsel %vm125, %v150, 0.0
  %v176 = vsel %vm126, %v151, 0.0
  %v177 = vsel %vm127, %v152, 0.0
  %v178 = vsel %vm128, %v153, 0.0
  %v179 = vsel %vm129, %v154, 0.0
  %v180 = vsel %vm130, %v155, 0.0
  %v181 = vsel %vm131, %v156, 0.0
  %v182 = vsel %vm132, %v157, 0.0
  %v183 = vsel %vm133, %v158, 0.0
  %v184 = vsel %vm134, %v159, 0.0
  %v185 = vsel %vm135, %v160, 0.0
  %v186 = vsel %vm136, %v161, 0.0
  %v187 = vsel %vm137, %v162, 0.0
  %v188 = vsel %vm138, %v163, 0.0
  %v189 = vmul.f32 %v164, %v164
  %v190 = vmul.f32 %v165, %v165
  %v191 = vmul.f32 %v166, %v166
  %v192 = vmul.f32 %v167, %v167
  %v193 = vmul.f32 %v168, %v168
  %v194 = vmul.f32 %v169, %v169
  %v195 = vmul.f32 %v170, %v170
  %v196 = vmul.f32 %v171, %v171
  %v197 = vmul.f32 %v172, %v172
  %v198 = vmul.f32 %v173, %v173
  %v199 = vmul.f32 %v174, %v174
  %v200 = vmul.f32 %v175, %v175
  %v201 = vmul.f32 %v176, %v176
  %v202 = vmul.f32 %v177, %v177
  %v203 = vmul.f32 %v178, %v178
  %v204 = vmul.f32 %v179, %v179
  %v205 = vmul.f32 %v180, %v180
  %v206 = vmul.f32 %v181, %v181
  %v207 = vmul.f32 %v182, %v182
  %v208 = vmul.f32 %v183, %v183
  %v209 = vmul.f32 %v184, %v184
  %v210 = vmul.f32 %v185, %v185
  %v211 = vmul.f32 %v186, %v186
  %v212 = vmul.f32 %v187, %v187
  %v213 = vmul.f32 %v188, %v188
  %v214 = vadd.f32 %v189, %v190
  %v215 = vadd.f32 %v214, %v191
  %v216 = vadd.f32 %v215, %v192
  %v217 = vadd.f32 %v216, %v193
  %v218 = vadd.f32 %v217, %v194
  %v219 = vadd.f32 %v218, %v195
  %v220 = vadd.f32 %v219, %v196
  %v221 = vadd.f32 %v220, %v197
  %v222 = vadd.f32 %v221, %v198
  %v223 = vadd.f32 %v222, %v199
  %v224 = vadd.f32 %v223, %v200
  %v225 = vadd.f32 %v224, %v201
  %v226 = vadd.f32 %v225, %v202
  %v227 = vadd.f32 %v226, %v203
  %v228 = vadd.f32 %v227, %v204
  %v229 = vadd.f32 %v228, %v205
  %v230 = vadd.f32 %v229, %v206
  %v231 = vadd.f32 %v230, %v207
  %v232 = vadd.f32 %v231, %v208
  %v233 = vadd.f32 %v232, %v209
  %v234 = vadd.f32 %v233, %v210
  %v235 = vadd.f32 %v234, %v211
  %v236 = vadd.f32 %v235, %v212
  %v237 = vadd.f32 %v236, %v213
  %v238 = vrot.slane %v237, 4
  %v239 = vadd.f32 %v237, %v238
  %v240 = vrot.slane %v239, 2
  %v241 = vadd.f32 %v239, %v240
  %v242 = vrot.slane %v241, 1
  %v243 = vadd.f32 %v241, %v242
  %v244 = vmul.f32 %v243, 0.005
  %v245 = vadd.f32 %v244, 1e-05
  %v246 = vrsqrt.pop %v245
  %v247 = vld [vmem:[%s1] sm:$0x1]
  %v248 = vmul.f32 %v246, %v247
  %v249 = vld [vmem:[%s2] sm:$0x1]
  %v250 = vmul.f32 %v87, %v248
  %v251 = vsub.f32 %v249, %v250
  %v252 = vlaneseq
  %v253 = vshrl.u32 %v252, 7
  %v254 = vsub.s32 0, %v253
  %v255 = vrot.slane %v248, %v254
  %v256 = vmul.f32 %v32, %v255
  %v257 = vmul.f32 %v33, %v255
  %v258 = vmul.f32 %v34, %v255
  %v259 = vmul.f32 %v35, %v255
  %v260 = vmul.f32 %v36, %v255
  %v261 = vmul.f32 %v37, %v255
  %v262 = vmul.f32 %v38, %v255
  %v263 = vmul.f32 %v39, %v255
  %v264 = vmul.f32 %v40, %v255
  %v265 = vmul.f32 %v41, %v255
  %v266 = vmul.f32 %v42, %v255
  %v267 = vmul.f32 %v43, %v255
  %v268 = vmul.f32 %v44, %v255
  %v269 = vmul.f32 %v45, %v255
  %v270 = vmul.f32 %v46, %v255
  %v271 = vmul.f32 %v47, %v255
  %v272 = vmul.f32 %v48, %v255
  %v273 = vmul.f32 %v49, %v255
  %v274 = vmul.f32 %v50, %v255
  %v275 = vmul.f32 %v51, %v255
  %v276 = vmul.f32 %v52, %v255
  %v277 = vmul.f32 %v53, %v255
  %v278 = vmul.f32 %v54, %v255
  %v279 = vmul.f32 %v55, %v255
  %v280 = vmul.f32 %v56, %v255
  %v282 = vlaneseq
  %v283 = vshrl.u32 %v282, 7
  %v284 = vsub.s32 0, %v283
  %v285 = vrot.slane %v251, %v284
  %v287 = vadd.f32 %v256, %v285
  %v288 = vadd.f32 %v257, %v285
  %v289 = vadd.f32 %v258, %v285
  %v290 = vadd.f32 %v259, %v285
  %v291 = vadd.f32 %v260, %v285
  %v292 = vadd.f32 %v261, %v285
  %v293 = vadd.f32 %v262, %v285
  %v294 = vadd.f32 %v263, %v285
  %v295 = vadd.f32 %v264, %v285
  %v296 = vadd.f32 %v265, %v285
  %v297 = vadd.f32 %v266, %v285
  %v298 = vadd.f32 %v267, %v285
  %v299 = vadd.f32 %v268, %v285
  %v300 = vadd.f32 %v269, %v285
  %v301 = vadd.f32 %v270, %v285
  %v302 = vadd.f32 %v271, %v285
  %v303 = vadd.f32 %v272, %v285
  %v304 = vadd.f32 %v273, %v285
  %v305 = vadd.f32 %v274, %v285
  %v306 = vadd.f32 %v275, %v285
  %v307 = vadd.f32 %v276, %v285
  %v308 = vadd.f32 %v277, %v285
  %v309 = vadd.f32 %v278, %v285
  %v310 = vadd.f32 %v279, %v285
  %v311 = vadd.f32 %v280, %v285
  %v312 = vld [vmem:[%s3] sm:$0xff]
  %v313 = vld [vmem:[%s3 + $0x8] sm:$0xff]
  %v314 = vld [vmem:[%s3 + $0x10] sm:$0xff]
  %v315 = vld [vmem:[%s3 + $0x18] sm:$0xff]
  %v316 = vld [vmem:[%s3 + $0x20] sm:$0xff]
  %v317 = vld [vmem:[%s3 + $0x28] sm:$0xff]
  %v318 = vld [vmem:[%s3 + $0x30] sm:$0xff]
  %v319 = vld [vmem:[%s3 + $0x38] sm:$0xff]
  %v320 = vld [vmem:[%s3 + $0x40] sm:$0xff]
  %v321 = vld [vmem:[%s3 + $0x48] sm:$0xff]
  %v322 = vld [vmem:[%s3 + $0x50] sm:$0xff]
  %v323 = vld [vmem:[%s3 + $0x58] sm:$0xff]
  %v324 = vld [vmem:[%s3 + $0x60] sm:$0xff]
  %v325 = vld [vmem:[%s3 + $0x68] sm:$0xff]
  %v326 = vld [vmem:[%s3 + $0x70] sm:$0xff]
  %v327 = vld [vmem:[%s3 + $0x78] sm:$0xff]
  %v328 = vld [vmem:[%s4] sm:$0x1]
  %v330 = vlaneseq
  %v331 = vshrl.u32 %v330, 7
  %v332 = vsub.s32 0, %v331
  %v333 = vrot.slane %v328, %v332
  %335 = vmatprep.subr.mxu0 0.0
  %336 = vmatpush1.msra.mxu0 %v312
  %337 = vmatprep.subr.mxu0 0.0
  %338 = vmatpush1.msra.mxu0 %v313
  %339 = vmatprep.subr.mxu0 0.0
  %340 = vmatpush1.msra.mxu0 %v314
  %341 = vmatprep.subr.mxu0 0.0
  %342 = vmatpush1.msra.mxu0 %v315
  %343 = vmatprep.subr.mxu0 0.0
  %344 = vmatpush1.msra.mxu0 %v316
  %345 = vmatprep.subr.mxu0 0.0
  %346 = vmatpush1.msra.mxu0 %v317
  %347 = vmatprep.subr.mxu0 0.0
  %348 = vmatpush1.msra.mxu0 %v318
  %349 = vmatprep.subr.mxu0 0.0
  %350 = vmatpush1.msra.mxu0 %v319
  %351 = vmatprep.subr.mxu0 0.0
  %352 = vmatpush1.msra.mxu0 %v320
  %353 = vmatprep.subr.mxu0 0.0
  %354 = vmatpush1.msra.mxu0 %v321
  %355 = vmatprep.subr.mxu0 0.0
  %356 = vmatpush1.msra.mxu0 %v322
  %357 = vmatprep.subr.mxu0 0.0
  %358 = vmatpush1.msra.mxu0 %v323
  %359 = vmatprep.subr.mxu0 0.0
  %360 = vmatpush1.msra.mxu0 %v324
  %361 = vmatprep.subr.mxu0 0.0
  %362 = vmatpush1.msra.mxu0 %v325
  %363 = vmatprep.subr.mxu0 0.0
  %364 = vmatpush1.msra.mxu0 %v326
  %365 = vmatprep.subr.mxu0 0.0
  %366 = vmatpush1.msra.mxu0 %v327
  %367 = vmatprep.subr.mxu0 0.0
  %368 = vmatpush1.msra.mxu0 0.0
  %369 = vmatprep.subr.mxu0 0.0
  %370 = vmatpush1.msra.mxu0 0.0
  %371 = vmatprep.subr.mxu0 0.0
  %372 = vmatpush1.msra.mxu0 0.0
  %373 = vmatprep.subr.mxu0 0.0
  %374 = vmatpush1.msra.mxu0 0.0
  %375 = vmatprep.subr.mxu0 0.0
  %376 = vmatpush1.msra.mxu0 0.0
  %377 = vmatprep.subr.mxu0 0.0
  %378 = vmatpush1.msra.mxu0 0.0
  %379 = vmatprep.subr.mxu0 0.0
  %380 = vmatpush1.msra.mxu0 0.0
  %381 = vmatprep.subr.mxu0 0.0
  %382 = vmatpush1.msra.mxu0 0.0
  %383 = vmatprep.subr.mxu0 0.0
  %384 = vmatpush1.msra.mxu0 0.0
  %385 = vmatprep.subr.mxu0 0.0
  %386 = vmatpush1.msra.mxu0 0.0
  %387 = vmatprep.subr.mxu0 0.0
  %388 = vmatpush1.msra.mxu0 0.0
  %389 = vmatprep.subr.mxu0 0.0
  %390 = vmatpush1.msra.mxu0 0.0
  %391 = vmatprep.subr.mxu0 0.0
  %392 = vmatpush1.msra.mxu0 0.0
  %393 = vmatprep.subr.mxu0 0.0
  %394 = vmatpush1.msra.mxu0 0.0
  %395 = vmatprep.subr.mxu0 0.0
  %396 = vmatpush1.msra.mxu0 0.0
  %397 = vmatprep.subr.mxu0 0.0
  %398 = vmatpush1.msra.mxu0 0.0
  %399 = vmatprep.mubr.f32.mxu0 0.0
  %400 = vmatmul.mubr.f32.gmra.mrb[0].mxu0 %v287
  %v401 = vpop.f32.mrb[0].mxu0
  %v402 = vadd.f32 %v333, %v401
  %v403 = vpop.f32.mrb[0].mxu0
  %404 = vmatprep.mubr.f32.mxu0 0.0
  %405 = vmatmul.mubr.f32.gmra.mrb[0].mxu0 %v288
  %v406 = vpop.f32.mrb[0].mxu0
  %v407 = vadd.f32 %v333, %v406
  %v408 = vpop.f32.mrb[0].mxu0
  %409 = vmatprep.mubr.f32.mxu0 0.0
  %410 = vmatmul.mubr.f32.gmra.mrb[0].mxu0 %v289
  %v411 = vpop.f32.mrb[0].mxu0
  %v412 = vadd.f32 %v333, %v411
  %v413 = vpop.f32.mrb[0].mxu0
  %414 = vmatprep.mubr.f32.mxu0 0.0
  %415 = vmatmul.mubr.f32.gmra.mrb[0].mxu0 %v290
  %v416 = vpop.f32.mrb[0].mxu0
  %v417 = vadd.f32 %v333, %v416
  %v418 = vpop.f32.mrb[0].mxu0
  %419 = vmatprep.mubr.f32.mxu0 0.0
  %420 = vmatmul.mubr.f32.gmra.mrb[0].mxu0 %v291
  %v421 = vpop.f32.mrb[0].mxu0
  %v422 = vadd.f32 %v333, %v421
  %v423 = vpop.f32.mrb[0].mxu0
  %424 = vmatprep.mubr.f32.mxu0 0.0
  %425 = vmatmul.mubr.f32.gmra.mrb[0].mxu0 %v292
  %v426 = vpop.f32.mrb[0].mxu0
  %v427 = vadd.f32 %v333, %v426
  %v428 = vpop.f32.mrb[0].mxu0
  %429 = vmatprep.mubr.f32.mxu0 0.0
  %430 = vmatmul.mubr.f32.gmra.mrb[0].mxu0 %v293
  %v431 = vpop.f32.mrb[0].mxu0
  %v432 = vadd.f32 %v333, %v431
  %v433 = vpop.f32.mrb[0].mxu0
  %434 = vmatprep.mubr.f32.mxu0 0.0
  %435 = vmatmul.mubr.f32.gmra.mrb[0].mxu0 %v294
  %v436 = vpop.f32.mrb[0].mxu0
  %v437 = vadd.f32 %v333, %v436
  %v438 = vpop.f32.mrb[0].mxu0
  %439 = vmatprep.mubr.f32.mxu0 0.0
  %440 = vmatmul.mubr.f32.gmra.mrb[0].mxu0 %v295
  %v441 = vpop.f32.mrb[0].mxu0
  %v442 = vadd.f32 %v333, %v441
  %v443 = vpop.f32.mrb[0].mxu0
  %444 = vmatprep.mubr.f32.mxu0 0.0
  %445 = vmatmul.mubr.f32.gmra.mrb[0].mxu0 %v296
  %v446 = vpop.f32.mrb[0].mxu0
  %v447 = vadd.f32 %v333, %v446
  %v448 = vpop.f32.mrb[0].mxu0
  %449 = vmatprep.mubr.f32.mxu0 0.0
  %450 = vmatmul.mubr.f32.gmra.mrb[0].mxu0 %v297
  %v451 = vpop.f32.mrb[0].mxu0
  %v452 = vadd.f32 %v333, %v451
  %v453 = vpop.f32.mrb[0].mxu0
  %454 = vmatprep.mubr.f32.mxu0 0.0
  %455 = vmatmul.mubr.f32.gmra.mrb[0].mxu0 %v298
  %v456 = vpop.f32.mrb[0].mxu0
  %v457 = vadd.f32 %v333, %v456
  %v458 = vpop.f32.mrb[0].mxu0
  %459 = vmatprep.mubr.f32.mxu0 0.0
  %460 = vmatmul.mubr.f32.gmra.mrb[0].mxu0 %v299
  %v461 = vpop.f32.mrb[0].mxu0
  %v462 = vadd.f32 %v333, %v461
  %v463 = vpop.f32.mrb[0].mxu0
  %464 = vmatprep.mubr.f32.mxu0 0.0
  %465 = vmatmul.mubr.f32.gmra.mrb[0].mxu0 %v300
  %v466 = vpop.f32.mrb[0].mxu0
  %v467 = vadd.f32 %v333, %v466
  %v468 = vpop.f32.mrb[0].mxu0
  %469 = vmatprep.mubr.f32.mxu0 0.0
  %470 = vmatmul.mubr.f32.gmra.mrb[0].mxu0 %v301
  %v471 = vpop.f32.mrb[0].mxu0
  %v472 = vadd.f32 %v333, %v471
  %v473 = vpop.f32.mrb[0].mxu0
  %474 = vmatprep.mubr.f32.mxu0 0.0
  %475 = vmatmul.mubr.f32.gmra.mrb[0].mxu0 %v302
  %v476 = vpop.f32.mrb[0].mxu0
  %v477 = vadd.f32 %v333, %v476
  %v478 = vpop.f32.mrb[0].mxu0
  %479 = vmatprep.mubr.f32.mxu0 0.0
  %480 = vmatmul.mubr.f32.gmra.mrb[0].mxu0 %v303
  %v481 = vpop.f32.mrb[0].mxu0
  %v482 = vadd.f32 %v333, %v481
  %v483 = vpop.f32.mrb[0].mxu0
  %484 = vmatprep.mubr.f32.mxu0 0.0
  %485 = vmatmul.mubr.f32.gmra.mrb[0].mxu0 %v304
  %v486 = vpop.f32.mrb[0].mxu0
  %v487 = vadd.f32 %v333, %v486
  %v488 = vpop.f32.mrb[0].mxu0
  %489 = vmatprep.mubr.f32.mxu0 0.0
  %490 = vmatmul.mubr.f32.gmra.mrb[0].mxu0 %v305
  %v491 = vpop.f32.mrb[0].mxu0
  %v492 = vadd.f32 %v333, %v491
  %v493 = vpop.f32.mrb[0].mxu0
  %494 = vmatprep.mubr.f32.mxu0 0.0
  %495 = vmatmul.mubr.f32.gmra.mrb[0].mxu0 %v306
  %v496 = vpop.f32.mrb[0].mxu0
  %v497 = vadd.f32 %v333, %v496
  %v498 = vpop.f32.mrb[0].mxu0
  %499 = vmatprep.mubr.f32.mxu0 0.0
  %500 = vmatmul.mubr.f32.gmra.mrb[0].mxu0 %v307
  %v501 = vpop.f32.mrb[0].mxu0
  %v502 = vadd.f32 %v333, %v501
  %v503 = vpop.f32.mrb[0].mxu0
  %504 = vmatprep.mubr.f32.mxu0 0.0
  %505 = vmatmul.mubr.f32.gmra.mrb[0].mxu0 %v308
  %v506 = vpop.f32.mrb[0].mxu0
  %v507 = vadd.f32 %v333, %v506
  %v508 = vpop.f32.mrb[0].mxu0
  %509 = vmatprep.mubr.f32.mxu0 0.0
  %510 = vmatmul.mubr.f32.gmra.mrb[0].mxu0 %v309
  %v511 = vpop.f32.mrb[0].mxu0
  %v512 = vadd.f32 %v333, %v511
  %v513 = vpop.f32.mrb[0].mxu0
  %514 = vmatprep.mubr.f32.mxu0 0.0
  %515 = vmatmul.mubr.f32.gmra.mrb[0].mxu0 %v310
  %v516 = vpop.f32.mrb[0].mxu0
  %v517 = vadd.f32 %v333, %v516
  %v518 = vpop.f32.mrb[0].mxu0
  %519 = vmatprep.mubr.f32.mxu0 0.0
  %520 = vmatmul.mubr.f32.gmra.mrb[0].mxu0 %v311
  %v521 = vpop.f32.mrb[0].mxu0
  %v522 = vadd.f32 %v333, %v521
  %v523 = vpop.f32.mrb[0].mxu0
  %524 = vdwg.mxu0
  %vm525 = vcmp.gt.f32.partialorder %v402, 0.0
  %vm526 = vcmp.gt.f32.partialorder %v407, 0.0
  %vm527 = vcmp.gt.f32.partialorder %v412, 0.0
  %vm528 = vcmp.gt.f32.partialorder %v417, 0.0
  %vm529 = vcmp.gt.f32.partialorder %v422, 0.0
  %vm530 = vcmp.gt.f32.partialorder %v427, 0.0
  %vm531 = vcmp.gt.f32.partialorder %v432, 0.0
  %vm532 = vcmp.gt.f32.partialorder %v437, 0.0
  %vm533 = vcmp.gt.f32.partialorder %v442, 0.0
  %vm534 = vcmp.gt.f32.partialorder %v447, 0.0
  %vm535 = vcmp.gt.f32.partialorder %v452, 0.0
  %vm536 = vcmp.gt.f32.partialorder %v457, 0.0
  %vm537 = vcmp.gt.f32.partialorder %v462, 0.0
  %vm538 = vcmp.gt.f32.partialorder %v467, 0.0
  %vm539 = vcmp.gt.f32.partialorder %v472, 0.0
  %vm540 = vcmp.gt.f32.partialorder %v477, 0.0
  %vm541 = vcmp.gt.f32.partialorder %v482, 0.0
  %vm542 = vcmp.gt.f32.partialorder %v487, 0.0
  %vm543 = vcmp.gt.f32.partialorder %v492, 0.0
  %vm544 = vcmp.gt.f32.partialorder %v497, 0.0
  %vm545 = vcmp.gt.f32.partialorder %v502, 0.0
  %vm546 = vcmp.gt.f32.partialorder %v507, 0.0
  %vm547 = vcmp.gt.f32.partialorder %v512, 0.0
  %vm548 = vcmp.gt.f32.partialorder %v517, 0.0
  %vm549 = vcmp.gt.f32.partialorder %v522, 0.0
  %v550 = vmul.f32 %v402, 0.01
  %v551 = vmul.f32 %v407, 0.01
  %v552 = vmul.f32 %v412, 0.01
  %v553 = vmul.f32 %v417, 0.01
  %v554 = vmul.f32 %v422, 0.01
  %v555 = vmul.f32 %v427, 0.01
  %v556 = vmul.f32 %v432, 0.01
  %v557 = vmul.f32 %v437, 0.01
  %v558 = vmul.f32 %v442, 0.01
  %v559 = vmul.f32 %v447, 0.01
  %v560 = vmul.f32 %v452, 0.01
  %v561 = vmul.f32 %v457, 0.01
  %v562 = vmul.f32 %v462, 0.01
  %v563 = vmul.f32 %v467, 0.01
  %v564 = vmul.f32 %v472, 0.01
  %v565 = vmul.f32 %v477, 0.01
  %v566 = vmul.f32 %v482, 0.01
  %v567 = vmul.f32 %v487, 0.01
  %v568 = vmul.f32 %v492, 0.01
  %v569 = vmul.f32 %v497, 0.01
  %v570 = vmul.f32 %v502, 0.01
  %v571 = vmul.f32 %v507, 0.01
  %v572 = vmul.f32 %v512, 0.01
  %v573 = vmul.f32 %v517, 0.01
  %v574 = vmul.f32 %v522, 0.01
  %v575 = vsel %vm525, %v402, %v550
  %v576 = vsel %vm526, %v407, %v551
  %v577 = vsel %vm527, %v412, %v552
  %v578 = vsel %vm528, %v417, %v553
  %v579 = vsel %vm529, %v422, %v554
  %v580 = vsel %vm530, %v427, %v555
  %v581 = vsel %vm531, %v432, %v556
  %v582 = vsel %vm532, %v437, %v557
  %v583 = vsel %vm533, %v442, %v558
  %v584 = vsel %vm534, %v447, %v559
  %v585 = vsel %vm535, %v452, %v560
  %v586 = vsel %vm536, %v457, %v561
  %v587 = vsel %vm537, %v462, %v562
  %v588 = vsel %vm538, %v467, %v563
  %v589 = vsel %vm539, %v472, %v564
  %v590 = vsel %vm540, %v477, %v565
  %v591 = vsel %vm541, %v482, %v566
  %v592 = vsel %vm542, %v487, %v567
  %v593 = vsel %vm543, %v492, %v568
  %v594 = vsel %vm544, %v497, %v569
  %v595 = vsel %vm545, %v502, %v570
  %v596 = vsel %vm546, %v507, %v571
  %v597 = vsel %vm547, %v512, %v572
  %v598 = vsel %vm548, %v517, %v573
  %v599 = vsel %vm549, %v522, %v574
  %v600 = vld [vmem:[%s5] sm:$0xff]
  %v601 = vld [vmem:[%s5 + $0x8] sm:$0xff]
  %v602 = vld [vmem:[%s5 + $0x10] sm:$0xff]
  %v603 = vld [vmem:[%s5 + $0x18] sm:$0xff]
  %v604 = vld [vmem:[%s5 + $0x20] sm:$0xff]
  %v605 = vld [vmem:[%s5 + $0x28] sm:$0xff]
  %v606 = vld [vmem:[%s5 + $0x30] sm:$0xff]
  %v607 = vld [vmem:[%s5 + $0x38] sm:$0xff]
  %v608 = vld [vmem:[%s5 + $0x40] sm:$0xff]
  %v609 = vld [vmem:[%s5 + $0x48] sm:$0xff]
  %v610 = vld [vmem:[%s5 + $0x50] sm:$0xff]
  %v611 = vld [vmem:[%s5 + $0x58] sm:$0xff]
  %v612 = vld [vmem:[%s5 + $0x60] sm:$0xff]
  %v613 = vld [vmem:[%s5 + $0x68] sm:$0xff]
  %v614 = vld [vmem:[%s5 + $0x70] sm:$0xff]
  %v615 = vld [vmem:[%s5 + $0x78] sm:$0xff]
  %v616 = vld [vmem:[%s6] sm:$0x1]
  %v618 = vlaneseq
  %v619 = vshrl.u32 %v618, 7
  %v620 = vsub.s32 0, %v619
  %v621 = vrot.slane %v616, %v620
  %623 = vmatprep.subr.mxu0 0.0
  %624 = vmatpush1.msra.mxu0 %v600
  %625 = vmatprep.subr.mxu0 0.0
  %626 = vmatpush1.msra.mxu0 %v601
  %627 = vmatprep.subr.mxu0 0.0
  %628 = vmatpush1.msra.mxu0 %v602
  %629 = vmatprep.subr.mxu0 0.0
  %630 = vmatpush1.msra.mxu0 %v603
  %631 = vmatprep.subr.mxu0 0.0
  %632 = vmatpush1.msra.mxu0 %v604
  %633 = vmatprep.subr.mxu0 0.0
  %634 = vmatpush1.msra.mxu0 %v605
  %635 = vmatprep.subr.mxu0 0.0
  %636 = vmatpush1.msra.mxu0 %v606
  %637 = vmatprep.subr.mxu0 0.0
  %638 = vmatpush1.msra.mxu0 %v607
  %639 = vmatprep.subr.mxu0 0.0
  %640 = vmatpush1.msra.mxu0 %v608
  %641 = vmatprep.subr.mxu0 0.0
  %642 = vmatpush1.msra.mxu0 %v609
  %643 = vmatprep.subr.mxu0 0.0
  %644 = vmatpush1.msra.mxu0 %v610
  %645 = vmatprep.subr.mxu0 0.0
  %646 = vmatpush1.msra.mxu0 %v611
  %647 = vmatprep.subr.mxu0 0.0
  %648 = vmatpush1.msra.mxu0 %v612
  %649 = vmatprep.subr.mxu0 0.0
  %650 = vmatpush1.msra.mxu0 %v613
  %651 = vmatprep.subr.mxu0 0.0
  %652 = vmatpush1.msra.mxu0 %v614
  %653 = vmatprep.subr.mxu0 0.0
  %654 = vmatpush1.msra.mxu0 %v615
  %655 = vmatprep.subr.mxu0 0.0
  %656 = vmatpush1.msra.mxu0 0.0
  %657 = vmatprep.subr.mxu0 0.0
  %658 = vmatpush1.msra.mxu0 0.0
  %659 = vmatprep.subr.mxu0 0.0
  %660 = vmatpush1.msra.mxu0 0.0
  %661 = vmatprep.subr.mxu0 0.0
  %662 = vmatpush1.msra.mxu0 0.0
  %663 = vmatprep.subr.mxu0 0.0
  %664 = vmatpush1.msra.mxu0 0.0
  %665 = vmatprep.subr.mxu0 0.0
  %666 = vmatpush1.msra.mxu0 0.0
  %667 = vmatprep.subr.mxu0 0.0
  %668 = vmatpush1.msra.mxu0 0.0
  %669 = vmatprep.subr.mxu0 0.0
  %670 = vmatpush1.msra.mxu0 0.0
  %671 = vmatprep.subr.mxu0 0.0
  %672 = vmatpush1.msra.mxu0 0.0
  %673 = vmatprep.subr.mxu0 0.0
  %674 = vmatpush1.msra.mxu0 0.0
  %675 = vmatprep.subr.mxu0 0.0
  %676 = vmatpush1.msra.mxu0 0.0
  %677 = vmatprep.subr.mxu0 0.0
  %678 = vmatpush1.msra.mxu0 0.0
  %679 = vmatprep.subr.mxu0 0.0
  %680 = vmatpush1.msra.mxu0 0.0
  %681 = vmatprep.subr.mxu0 0.0
  %682 = vmatpush1.msra.mxu0 0.0
  %683 = vmatprep.subr.mxu0 0.0
  %684 = vmatpush1.msra.mxu0 0.0
  %685 = vmatprep.subr.mxu0 0.0
  %686 = vmatpush1.msra.mxu0 0.0
  %687 = vmatprep.mubr.f32.mxu0 0.0
  %688 = vmatmul.mubr.f32.gmra.mrb[0].mxu0 %v575
  %v689 = vpop.f32.mrb[0].mxu0
  %v690 = vadd.f32 %v621, %v689
  %v691 = vpop.f32.mrb[0].mxu0
  %692 = vmatprep.mubr.f32.mxu0 0.0
  %693 = vmatmul.mubr.f32.gmra.mrb[0].mxu0 %v576
  %v694 = vpop.f32.mrb[0].mxu0
  %v695 = vadd.f32 %v621, %v694
  %v696 = vpop.f32.mrb[0].mxu0
  %697 = vmatprep.mubr.f32.mxu0 0.0
  %698 = vmatmul.mubr.f32.gmra.mrb[0].mxu0 %v577
  %v699 = vpop.f32.mrb[0].mxu0
  %v700 = vadd.f32 %v621, %v699
  %v701 = vpop.f32.mrb[0].mxu0
  %702 = vmatprep.mubr.f32.mxu0 0.0
  %703 = vmatmul.mubr.f32.gmra.mrb[0].mxu0 %v578
  %v704 = vpop.f32.mrb[0].mxu0
  %v705 = vadd.f32 %v621, %v704
  %v706 = vpop.f32.mrb[0].mxu0
  %707 = vmatprep.mubr.f32.mxu0 0.0
  %708 = vmatmul.mubr.f32.gmra.mrb[0].mxu0 %v579
  %v709 = vpop.f32.mrb[0].mxu0
  %v710 = vadd.f32 %v621, %v709
  %v711 = vpop.f32.mrb[0].mxu0
  %712 = vmatprep.mubr.f32.mxu0 0.0
  %713 = vmatmul.mubr.f32.gmra.mrb[0].mxu0 %v580
  %v714 = vpop.f32.mrb[0].mxu0
  %v715 = vadd.f32 %v621, %v714
  %v716 = vpop.f32.mrb[0].mxu0
  %717 = vmatprep.mubr.f32.mxu0 0.0
  %718 = vmatmul.mubr.f32.gmra.mrb[0].mxu0 %v581
  %v719 = vpop.f32.mrb[0].mxu0
  %v720 = vadd.f32 %v621, %v719
  %v721 = vpop.f32.mrb[0].mxu0
  %722 = vmatprep.mubr.f32.mxu0 0.0
  %723 = vmatmul.mubr.f32.gmra.mrb[0].mxu0 %v582
  %v724 = vpop.f32.mrb[0].mxu0
  %v725 = vadd.f32 %v621, %v724
  %v726 = vpop.f32.mrb[0].mxu0
  %727 = vmatprep.mubr.f32.mxu0 0.0
  %728 = vmatmul.mubr.f32.gmra.mrb[0].mxu0 %v583
  %v729 = vpop.f32.mrb[0].mxu0
  %v730 = vadd.f32 %v621, %v729
  %v731 = vpop.f32.mrb[0].mxu0
  %732 = vmatprep.mubr.f32.mxu0 0.0
  %733 = vmatmul.mubr.f32.gmra.mrb[0].mxu0 %v584
  %v734 = vpop.f32.mrb[0].mxu0
  %v735 = vadd.f32 %v621, %v734
  %v736 = vpop.f32.mrb[0].mxu0
  %737 = vmatprep.mubr.f32.mxu0 0.0
  %738 = vmatmul.mubr.f32.gmra.mrb[0].mxu0 %v585
  %v739 = vpop.f32.mrb[0].mxu0
  %v740 = vadd.f32 %v621, %v739
  %v741 = vpop.f32.mrb[0].mxu0
  %742 = vmatprep.mubr.f32.mxu0 0.0
  %743 = vmatmul.mubr.f32.gmra.mrb[0].mxu0 %v586
  %v744 = vpop.f32.mrb[0].mxu0
  %v745 = vadd.f32 %v621, %v744
  %v746 = vpop.f32.mrb[0].mxu0
  %747 = vmatprep.mubr.f32.mxu0 0.0
  %748 = vmatmul.mubr.f32.gmra.mrb[0].mxu0 %v587
  %v749 = vpop.f32.mrb[0].mxu0
  %v750 = vadd.f32 %v621, %v749
  %v751 = vpop.f32.mrb[0].mxu0
  %752 = vmatprep.mubr.f32.mxu0 0.0
  %753 = vmatmul.mubr.f32.gmra.mrb[0].mxu0 %v588
  %v754 = vpop.f32.mrb[0].mxu0
  %v755 = vadd.f32 %v621, %v754
  %v756 = vpop.f32.mrb[0].mxu0
  %757 = vmatprep.mubr.f32.mxu0 0.0
  %758 = vmatmul.mubr.f32.gmra.mrb[0].mxu0 %v589
  %v759 = vpop.f32.mrb[0].mxu0
  %v760 = vadd.f32 %v621, %v759
  %v761 = vpop.f32.mrb[0].mxu0
  %762 = vmatprep.mubr.f32.mxu0 0.0
  %763 = vmatmul.mubr.f32.gmra.mrb[0].mxu0 %v590
  %v764 = vpop.f32.mrb[0].mxu0
  %v765 = vadd.f32 %v621, %v764
  %v766 = vpop.f32.mrb[0].mxu0
  %767 = vmatprep.mubr.f32.mxu0 0.0
  %768 = vmatmul.mubr.f32.gmra.mrb[0].mxu0 %v591
  %v769 = vpop.f32.mrb[0].mxu0
  %v770 = vadd.f32 %v621, %v769
  %v771 = vpop.f32.mrb[0].mxu0
  %772 = vmatprep.mubr.f32.mxu0 0.0
  %773 = vmatmul.mubr.f32.gmra.mrb[0].mxu0 %v592
  %v774 = vpop.f32.mrb[0].mxu0
  %v775 = vadd.f32 %v621, %v774
  %v776 = vpop.f32.mrb[0].mxu0
  %777 = vmatprep.mubr.f32.mxu0 0.0
  %778 = vmatmul.mubr.f32.gmra.mrb[0].mxu0 %v593
  %v779 = vpop.f32.mrb[0].mxu0
  %v780 = vadd.f32 %v621, %v779
  %v781 = vpop.f32.mrb[0].mxu0
  %782 = vmatprep.mubr.f32.mxu0 0.0
  %783 = vmatmul.mubr.f32.gmra.mrb[0].mxu0 %v594
  %v784 = vpop.f32.mrb[0].mxu0
  %v785 = vadd.f32 %v621, %v784
  %v786 = vpop.f32.mrb[0].mxu0
  %787 = vmatprep.mubr.f32.mxu0 0.0
  %788 = vmatmul.mubr.f32.gmra.mrb[0].mxu0 %v595
  %v789 = vpop.f32.mrb[0].mxu0
  %v790 = vadd.f32 %v621, %v789
  %v791 = vpop.f32.mrb[0].mxu0
  %792 = vmatprep.mubr.f32.mxu0 0.0
  %793 = vmatmul.mubr.f32.gmra.mrb[0].mxu0 %v596
  %v794 = vpop.f32.mrb[0].mxu0
  %v795 = vadd.f32 %v621, %v794
  %v796 = vpop.f32.mrb[0].mxu0
  %797 = vmatprep.mubr.f32.mxu0 0.0
  %798 = vmatmul.mubr.f32.gmra.mrb[0].mxu0 %v597
  %v799 = vpop.f32.mrb[0].mxu0
  %v800 = vadd.f32 %v621, %v799
  %v801 = vpop.f32.mrb[0].mxu0
  %802 = vmatprep.mubr.f32.mxu0 0.0
  %803 = vmatmul.mubr.f32.gmra.mrb[0].mxu0 %v598
  %v804 = vpop.f32.mrb[0].mxu0
  %v805 = vadd.f32 %v621, %v804
  %v806 = vpop.f32.mrb[0].mxu0
  %807 = vmatprep.mubr.f32.mxu0 0.0
  %808 = vmatmul.mubr.f32.gmra.mrb[0].mxu0 %v599
  %v809 = vpop.f32.mrb[0].mxu0
  %v810 = vadd.f32 %v621, %v809
  %v811 = vpop.f32.mrb[0].mxu0
  %812 = vdwg.mxu0
  %vm813 = vcmp.gt.f32.partialorder %v690, 0.0
  %vm814 = vcmp.gt.f32.partialorder %v695, 0.0
  %vm815 = vcmp.gt.f32.partialorder %v700, 0.0
  %vm816 = vcmp.gt.f32.partialorder %v705, 0.0
  %vm817 = vcmp.gt.f32.partialorder %v710, 0.0
  %vm818 = vcmp.gt.f32.partialorder %v715, 0.0
  %vm819 = vcmp.gt.f32.partialorder %v720, 0.0
  %vm820 = vcmp.gt.f32.partialorder %v725, 0.0
  %vm821 = vcmp.gt.f32.partialorder %v730, 0.0
  %vm822 = vcmp.gt.f32.partialorder %v735, 0.0
  %vm823 = vcmp.gt.f32.partialorder %v740, 0.0
  %vm824 = vcmp.gt.f32.partialorder %v745, 0.0
  %vm825 = vcmp.gt.f32.partialorder %v750, 0.0
  %vm826 = vcmp.gt.f32.partialorder %v755, 0.0
  %vm827 = vcmp.gt.f32.partialorder %v760, 0.0
  %vm828 = vcmp.gt.f32.partialorder %v765, 0.0
  %vm829 = vcmp.gt.f32.partialorder %v770, 0.0
  %vm830 = vcmp.gt.f32.partialorder %v775, 0.0
  %vm831 = vcmp.gt.f32.partialorder %v780, 0.0
  %vm832 = vcmp.gt.f32.partialorder %v785, 0.0
  %vm833 = vcmp.gt.f32.partialorder %v790, 0.0
  %vm834 = vcmp.gt.f32.partialorder %v795, 0.0
  %vm835 = vcmp.gt.f32.partialorder %v800, 0.0
  %vm836 = vcmp.gt.f32.partialorder %v805, 0.0
  %vm837 = vcmp.gt.f32.partialorder %v810, 0.0
  %v838 = vmul.f32 %v690, 0.01
  %v839 = vmul.f32 %v695, 0.01
  %v840 = vmul.f32 %v700, 0.01
  %v841 = vmul.f32 %v705, 0.01
  %v842 = vmul.f32 %v710, 0.01
  %v843 = vmul.f32 %v715, 0.01
  %v844 = vmul.f32 %v720, 0.01
  %v845 = vmul.f32 %v725, 0.01
  %v846 = vmul.f32 %v730, 0.01
  %v847 = vmul.f32 %v735, 0.01
  %v848 = vmul.f32 %v740, 0.01
  %v849 = vmul.f32 %v745, 0.01
  %v850 = vmul.f32 %v750, 0.01
  %v851 = vmul.f32 %v755, 0.01
  %v852 = vmul.f32 %v760, 0.01
  %v853 = vmul.f32 %v765, 0.01
  %v854 = vmul.f32 %v770, 0.01
  %v855 = vmul.f32 %v775, 0.01
  %v856 = vmul.f32 %v780, 0.01
  %v857 = vmul.f32 %v785, 0.01
  %v858 = vmul.f32 %v790, 0.01
  %v859 = vmul.f32 %v795, 0.01
  %v860 = vmul.f32 %v800, 0.01
  %v861 = vmul.f32 %v805, 0.01
  %v862 = vmul.f32 %v810, 0.01
  %v863 = vsel %vm813, %v690, %v838
  %v864 = vsel %vm814, %v695, %v839
  %v865 = vsel %vm815, %v700, %v840
  %v866 = vsel %vm816, %v705, %v841
  %v867 = vsel %vm817, %v710, %v842
  %v868 = vsel %vm818, %v715, %v843
  %v869 = vsel %vm819, %v720, %v844
  %v870 = vsel %vm820, %v725, %v845
  %v871 = vsel %vm821, %v730, %v846
  %v872 = vsel %vm822, %v735, %v847
  %v873 = vsel %vm823, %v740, %v848
  %v874 = vsel %vm824, %v745, %v849
  %v875 = vsel %vm825, %v750, %v850
  %v876 = vsel %vm826, %v755, %v851
  %v877 = vsel %vm827, %v760, %v852
  %v878 = vsel %vm828, %v765, %v853
  %v879 = vsel %vm829, %v770, %v854
  %v880 = vsel %vm830, %v775, %v855
  %v881 = vsel %vm831, %v780, %v856
  %v882 = vsel %vm832, %v785, %v857
  %v883 = vsel %vm833, %v790, %v858
  %v884 = vsel %vm834, %v795, %v859
  %v885 = vsel %vm835, %v800, %v860
  %v886 = vsel %vm836, %v805, %v861
  %v887 = vsel %vm837, %v810, %v862
  %v888 = vld [vmem:[%s7] sm:$0xff]
  %v889 = vld [vmem:[%s7 + $0x8] sm:$0xff]
  %v890 = vld [vmem:[%s7 + $0x10] sm:$0xff]
  %v891 = vld [vmem:[%s7 + $0x18] sm:$0xff]
  %v892 = vld [vmem:[%s7 + $0x20] sm:$0xff]
  %v893 = vld [vmem:[%s7 + $0x28] sm:$0xff]
  %v894 = vld [vmem:[%s7 + $0x30] sm:$0xff]
  %v895 = vld [vmem:[%s7 + $0x38] sm:$0xff]
  %v896 = vld [vmem:[%s7 + $0x40] sm:$0xff]
  %v897 = vld [vmem:[%s7 + $0x48] sm:$0xff]
  %v898 = vld [vmem:[%s7 + $0x50] sm:$0xff]
  %v899 = vld [vmem:[%s7 + $0x58] sm:$0xff]
  %v900 = vld [vmem:[%s7 + $0x60] sm:$0xff]
  %v901 = vld [vmem:[%s7 + $0x68] sm:$0xff]
  %v902 = vld [vmem:[%s7 + $0x70] sm:$0xff]
  %v903 = vld [vmem:[%s7 + $0x78] sm:$0xff]
  %v904 = vld [vmem:[%s8] sm:$0x1]
  %v906 = vlaneseq
  %v907 = vshrl.u32 %v906, 7
  %v908 = vsub.s32 0, %v907
  %v909 = vrot.slane %v904, %v908
  %911 = vmatprep.subr.mxu0 0.0
  %912 = vmatpush1.msra.mxu0 %v888
  %913 = vmatprep.subr.mxu0 0.0
  %914 = vmatpush1.msra.mxu0 %v889
  %915 = vmatprep.subr.mxu0 0.0
  %916 = vmatpush1.msra.mxu0 %v890
  %917 = vmatprep.subr.mxu0 0.0
  %918 = vmatpush1.msra.mxu0 %v891
  %919 = vmatprep.subr.mxu0 0.0
  %920 = vmatpush1.msra.mxu0 %v892
  %921 = vmatprep.subr.mxu0 0.0
  %922 = vmatpush1.msra.mxu0 %v893
  %923 = vmatprep.subr.mxu0 0.0
  %924 = vmatpush1.msra.mxu0 %v894
  %925 = vmatprep.subr.mxu0 0.0
  %926 = vmatpush1.msra.mxu0 %v895
  %927 = vmatprep.subr.mxu0 0.0
  %928 = vmatpush1.msra.mxu0 %v896
  %929 = vmatprep.subr.mxu0 0.0
  %930 = vmatpush1.msra.mxu0 %v897
  %931 = vmatprep.subr.mxu0 0.0
  %932 = vmatpush1.msra.mxu0 %v898
  %933 = vmatprep.subr.mxu0 0.0
  %934 = vmatpush1.msra.mxu0 %v899
  %935 = vmatprep.subr.mxu0 0.0
  %936 = vmatpush1.msra.mxu0 %v900
  %937 = vmatprep.subr.mxu0 0.0
  %938 = vmatpush1.msra.mxu0 %v901
  %939 = vmatprep.subr.mxu0 0.0
  %940 = vmatpush1.msra.mxu0 %v902
  %941 = vmatprep.subr.mxu0 0.0
  %942 = vmatpush1.msra.mxu0 %v903
  %943 = vmatprep.subr.mxu0 0.0
  %944 = vmatpush1.msra.mxu0 0.0
  %945 = vmatprep.subr.mxu0 0.0
  %946 = vmatpush1.msra.mxu0 0.0
  %947 = vmatprep.subr.mxu0 0.0
  %948 = vmatpush1.msra.mxu0 0.0
  %949 = vmatprep.subr.mxu0 0.0
  %950 = vmatpush1.msra.mxu0 0.0
  %951 = vmatprep.subr.mxu0 0.0
  %952 = vmatpush1.msra.mxu0 0.0
  %953 = vmatprep.subr.mxu0 0.0
  %954 = vmatpush1.msra.mxu0 0.0
  %955 = vmatprep.subr.mxu0 0.0
  %956 = vmatpush1.msra.mxu0 0.0
  %957 = vmatprep.subr.mxu0 0.0
  %958 = vmatpush1.msra.mxu0 0.0
  %959 = vmatprep.subr.mxu0 0.0
  %960 = vmatpush1.msra.mxu0 0.0
  %961 = vmatprep.subr.mxu0 0.0
  %962 = vmatpush1.msra.mxu0 0.0
  %963 = vmatprep.subr.mxu0 0.0
  %964 = vmatpush1.msra.mxu0 0.0
  %965 = vmatprep.subr.mxu0 0.0
  %966 = vmatpush1.msra.mxu0 0.0
  %967 = vmatprep.subr.mxu0 0.0
  %968 = vmatpush1.msra.mxu0 0.0
  %969 = vmatprep.subr.mxu0 0.0
  %970 = vmatpush1.msra.mxu0 0.0
  %971 = vmatprep.subr.mxu0 0.0
  %972 = vmatpush1.msra.mxu0 0.0
  %973 = vmatprep.subr.mxu0 0.0
  %974 = vmatpush1.msra.mxu0 0.0
  %975 = vmatprep.mubr.f32.mxu0 0.0
  %976 = vmatmul.mubr.f32.gmra.mrb[0].mxu0 %v863
  %v977 = vpop.f32.mrb[0].mxu0
  %v978 = vadd.f32 %v909, %v977
  %v979 = vpop.f32.mrb[0].mxu0
  %980 = vmatprep.mubr.f32.mxu0 0.0
  %981 = vmatmul.mubr.f32.gmra.mrb[0].mxu0 %v864
  %v982 = vpop.f32.mrb[0].mxu0
  %v983 = vadd.f32 %v909, %v982
  %v984 = vpop.f32.mrb[0].mxu0
  %985 = vmatprep.mubr.f32.mxu0 0.0
  %986 = vmatmul.mubr.f32.gmra.mrb[0].mxu0 %v865
  %v987 = vpop.f32.mrb[0].mxu0
  %v988 = vadd.f32 %v909, %v987
  %v989 = vpop.f32.mrb[0].mxu0
  %990 = vmatprep.mubr.f32.mxu0 0.0
  %991 = vmatmul.mubr.f32.gmra.mrb[0].mxu0 %v866
  %v992 = vpop.f32.mrb[0].mxu0
  %v993 = vadd.f32 %v909, %v992
  %v994 = vpop.f32.mrb[0].mxu0
  %995 = vmatprep.mubr.f32.mxu0 0.0
  %996 = vmatmul.mubr.f32.gmra.mrb[0].mxu0 %v867
  %v997 = vpop.f32.mrb[0].mxu0
  %v998 = vadd.f32 %v909, %v997
  %v999 = vpop.f32.mrb[0].mxu0
  %1000 = vmatprep.mubr.f32.mxu0 0.0
  %1001 = vmatmul.mubr.f32.gmra.mrb[0].mxu0 %v868
  %v1002 = vpop.f32.mrb[0].mxu0
  %v1003 = vadd.f32 %v909, %v1002
  %v1004 = vpop.f32.mrb[0].mxu0
  %1005 = vmatprep.mubr.f32.mxu0 0.0
  %1006 = vmatmul.mubr.f32.gmra.mrb[0].mxu0 %v869
  %v1007 = vpop.f32.mrb[0].mxu0
  %v1008 = vadd.f32 %v909, %v1007
  %v1009 = vpop.f32.mrb[0].mxu0
  %1010 = vmatprep.mubr.f32.mxu0 0.0
  %1011 = vmatmul.mubr.f32.gmra.mrb[0].mxu0 %v870
  %v1012 = vpop.f32.mrb[0].mxu0
  %v1013 = vadd.f32 %v909, %v1012
  %v1014 = vpop.f32.mrb[0].mxu0
  %1015 = vmatprep.mubr.f32.mxu0 0.0
  %1016 = vmatmul.mubr.f32.gmra.mrb[0].mxu0 %v871
  %v1017 = vpop.f32.mrb[0].mxu0
  %v1018 = vadd.f32 %v909, %v1017
  %v1019 = vpop.f32.mrb[0].mxu0
  %1020 = vmatprep.mubr.f32.mxu0 0.0
  %1021 = vmatmul.mubr.f32.gmra.mrb[0].mxu0 %v872
  %v1022 = vpop.f32.mrb[0].mxu0
  %v1023 = vadd.f32 %v909, %v1022
  %v1024 = vpop.f32.mrb[0].mxu0
  %1025 = vmatprep.mubr.f32.mxu0 0.0
  %1026 = vmatmul.mubr.f32.gmra.mrb[0].mxu0 %v873
  %v1027 = vpop.f32.mrb[0].mxu0
  %v1028 = vadd.f32 %v909, %v1027
  %v1029 = vpop.f32.mrb[0].mxu0
  %1030 = vmatprep.mubr.f32.mxu0 0.0
  %1031 = vmatmul.mubr.f32.gmra.mrb[0].mxu0 %v874
  %v1032 = vpop.f32.mrb[0].mxu0
  %v1033 = vadd.f32 %v909, %v1032
  %v1034 = vpop.f32.mrb[0].mxu0
  %1035 = vmatprep.mubr.f32.mxu0 0.0
  %1036 = vmatmul.mubr.f32.gmra.mrb[0].mxu0 %v875
  %v1037 = vpop.f32.mrb[0].mxu0
  %v1038 = vadd.f32 %v909, %v1037
  %v1039 = vpop.f32.mrb[0].mxu0
  %1040 = vmatprep.mubr.f32.mxu0 0.0
  %1041 = vmatmul.mubr.f32.gmra.mrb[0].mxu0 %v876
  %v1042 = vpop.f32.mrb[0].mxu0
  %v1043 = vadd.f32 %v909, %v1042
  %v1044 = vpop.f32.mrb[0].mxu0
  %1045 = vmatprep.mubr.f32.mxu0 0.0
  %1046 = vmatmul.mubr.f32.gmra.mrb[0].mxu0 %v877
  %v1047 = vpop.f32.mrb[0].mxu0
  %v1048 = vadd.f32 %v909, %v1047
  %v1049 = vpop.f32.mrb[0].mxu0
  %1050 = vmatprep.mubr.f32.mxu0 0.0
  %1051 = vmatmul.mubr.f32.gmra.mrb[0].mxu0 %v878
  %v1052 = vpop.f32.mrb[0].mxu0
  %v1053 = vadd.f32 %v909, %v1052
  %v1054 = vpop.f32.mrb[0].mxu0
  %1055 = vmatprep.mubr.f32.mxu0 0.0
  %1056 = vmatmul.mubr.f32.gmra.mrb[0].mxu0 %v879
  %v1057 = vpop.f32.mrb[0].mxu0
  %v1058 = vadd.f32 %v909, %v1057
  %v1059 = vpop.f32.mrb[0].mxu0
  %1060 = vmatprep.mubr.f32.mxu0 0.0
  %1061 = vmatmul.mubr.f32.gmra.mrb[0].mxu0 %v880
  %v1062 = vpop.f32.mrb[0].mxu0
  %v1063 = vadd.f32 %v909, %v1062
  %v1064 = vpop.f32.mrb[0].mxu0
  %1065 = vmatprep.mubr.f32.mxu0 0.0
  %1066 = vmatmul.mubr.f32.gmra.mrb[0].mxu0 %v881
  %v1067 = vpop.f32.mrb[0].mxu0
  %v1068 = vadd.f32 %v909, %v1067
  %v1069 = vpop.f32.mrb[0].mxu0
  %1070 = vmatprep.mubr.f32.mxu0 0.0
  %1071 = vmatmul.mubr.f32.gmra.mrb[0].mxu0 %v882
  %v1072 = vpop.f32.mrb[0].mxu0
  %v1073 = vadd.f32 %v909, %v1072
  %v1074 = vpop.f32.mrb[0].mxu0
  %1075 = vmatprep.mubr.f32.mxu0 0.0
  %1076 = vmatmul.mubr.f32.gmra.mrb[0].mxu0 %v883
  %v1077 = vpop.f32.mrb[0].mxu0
  %v1078 = vadd.f32 %v909, %v1077
  %v1079 = vpop.f32.mrb[0].mxu0
  %1080 = vmatprep.mubr.f32.mxu0 0.0
  %1081 = vmatmul.mubr.f32.gmra.mrb[0].mxu0 %v884
  %v1082 = vpop.f32.mrb[0].mxu0
  %v1083 = vadd.f32 %v909, %v1082
  %v1084 = vpop.f32.mrb[0].mxu0
  %1085 = vmatprep.mubr.f32.mxu0 0.0
  %1086 = vmatmul.mubr.f32.gmra.mrb[0].mxu0 %v885
  %v1087 = vpop.f32.mrb[0].mxu0
  %v1088 = vadd.f32 %v909, %v1087
  %v1089 = vpop.f32.mrb[0].mxu0
  %1090 = vmatprep.mubr.f32.mxu0 0.0
  %1091 = vmatmul.mubr.f32.gmra.mrb[0].mxu0 %v886
  %v1092 = vpop.f32.mrb[0].mxu0
  %v1093 = vadd.f32 %v909, %v1092
  %v1094 = vpop.f32.mrb[0].mxu0
  %1095 = vmatprep.mubr.f32.mxu0 0.0
  %1096 = vmatmul.mubr.f32.gmra.mrb[0].mxu0 %v887
  %v1097 = vpop.f32.mrb[0].mxu0
  %v1098 = vadd.f32 %v909, %v1097
  %v1099 = vpop.f32.mrb[0].mxu0
  %1100 = vdwg.mxu0
  %v1101 = vtanh.pop %v978
  %v1102 = vtanh.pop %v983
  %v1103 = vtanh.pop %v988
  %v1104 = vtanh.pop %v993
  %v1105 = vtanh.pop %v998
  %v1106 = vtanh.pop %v1003
  %v1107 = vtanh.pop %v1008
  %v1108 = vtanh.pop %v1013
  %v1109 = vtanh.pop %v1018
  %v1110 = vtanh.pop %v1023
  %v1111 = vtanh.pop %v1028
  %v1112 = vtanh.pop %v1033
  %v1113 = vtanh.pop %v1038
  %v1114 = vtanh.pop %v1043
  %v1115 = vtanh.pop %v1048
  %v1116 = vtanh.pop %v1053
  %v1117 = vtanh.pop %v1058
  %v1118 = vtanh.pop %v1063
  %v1119 = vtanh.pop %v1068
  %v1120 = vtanh.pop %v1073
  %v1121 = vtanh.pop %v1078
  %v1122 = vtanh.pop %v1083
  %v1123 = vtanh.pop %v1088
  %v1124 = vtanh.pop %v1093
  %v1125 = vtanh.pop %v1098
  %1126 = vst [vmem:[%s9] sm:$0xff] %v1101
  %1127 = vst [vmem:[%s9 + $0x8] sm:$0xff] %v1102
  %1128 = vst [vmem:[%s9 + $0x10] sm:$0xff] %v1103
  %1129 = vst [vmem:[%s9 + $0x18] sm:$0xff] %v1104
  %1130 = vst [vmem:[%s9 + $0x20] sm:$0xff] %v1105
  %1131 = vst [vmem:[%s9 + $0x28] sm:$0xff] %v1106
  %1132 = vst [vmem:[%s9 + $0x30] sm:$0xff] %v1107
  %1133 = vst [vmem:[%s9 + $0x38] sm:$0xff] %v1108
  %1134 = vst [vmem:[%s9 + $0x40] sm:$0xff] %v1109
  %1135 = vst [vmem:[%s9 + $0x48] sm:$0xff] %v1110
  %1136 = vst [vmem:[%s9 + $0x50] sm:$0xff] %v1111
  %1137 = vst [vmem:[%s9 + $0x58] sm:$0xff] %v1112
  %1138 = vst [vmem:[%s9 + $0x60] sm:$0xff] %v1113
  %1139 = vst [vmem:[%s9 + $0x68] sm:$0xff] %v1114
  %1140 = vst [vmem:[%s9 + $0x70] sm:$0xff] %v1115
  %1141 = vst [vmem:[%s9 + $0x78] sm:$0xff] %v1116
  %1142 = vst [vmem:[%s9 + $0x80] sm:$0xff] %v1117
  %1143 = vst [vmem:[%s9 + $0x88] sm:$0xff] %v1118
  %1144 = vst [vmem:[%s9 + $0x90] sm:$0xff] %v1119
  %1145 = vst [vmem:[%s9 + $0x98] sm:$0xff] %v1120
  %1146 = vst [vmem:[%s9 + $0xa0] sm:$0xff] %v1121
  %1147 = vst [vmem:[%s9 + $0xa8] sm:$0xff] %v1122
  %1148 = vst [vmem:[%s9 + $0xb0] sm:$0xff] %v1123
  %1149 = vst [vmem:[%s9 + $0xb8] sm:$0xff] %v1124
  %1150 = vst [vmem:[%s9 + $0xc0] sm:$0xff] %v1125
  // Predicated region
  $region38: #{actor_forward.1} parent=0 // pred_check
    _
  $region39: #{actor_forward.1} parent=0 // pred_check_branch
    %1152 = sbr.rel (0) target = $region41
  $region40: #{actor_forward.1} parent=0 // pred_region
    _
  $region41: #{actor_forward.1} parent=0 // pred_fallthru
    _
  // Predicated region
  $region42: #{actor_forward.1} parent=0 // pred_check
    _
  $region43: #{actor_forward.1} parent=0 // pred_check_branch
    %1154 = sbr.rel (0) target = $region45
  $region44: #{actor_forward.1} parent=0 // pred_region
    _
  $region45: #{actor_forward.1} parent=0 // pred_fallthru
    _

</llo_original>
